<compile_context>
chip_gen: v7x
topology: tpu7x:2x2x1
jax: 0.10.0
libtpu: 0.0.40
codegen_flags: <defaults>
</compile_context>

<pallas_src>
import jax
import jax.numpy as jnp
from jax.experimental import pallas as pl
from jax.experimental.pallas import tpu as pltpu


def _round_up(n, m):
    return ((n + m - 1) // m) * m


def _cdiv(a, b):
    return (a + b - 1) // b


def _proj_sigmoid_kernel(x_ref, wt_ref, b_ref, o_ref):
    # x_ref : (tn, D)        token tile (batch dim squeezed by BlockSpec)
    # wt_ref: (D, d_model)   weight, pre-transposed once in the wrapper, VMEM-resident
    # b_ref : (1, d_model)   bias, VMEM-resident
    # o_ref : (tn, d_model)
    y = jnp.dot(x_ref[...], wt_ref[...], preferred_element_type=jnp.float32)
    y = y + b_ref[...].astype(jnp.float32)
    o_ref[...] = jax.nn.sigmoid(y).astype(o_ref.dtype)


def mask_transformer2_forward(x, weight, bias, im_size, patch_size=1, *, tn_max=2048):
    """x: (B, N, d_encoder) with N = H*W tokens.
    weight: (d_model, d_encoder) [native PyTorch Linear layout], bias: (d_model,).
    Returns masks: (B, d_model, GS, N // GS) after sigmoid (matches the rearrange)."""
    H, W = im_size
    GS = H // patch_size
    B, N, D = x.shape
    d_model = weight.shape[0]

    # Token tile: multiple of 128, no bigger than needed, and shrunk until the
    # grid has >= 4 steps so both v7x TensorCores get work and the pipeline
    # actually overlaps DMA with compute.  N is NOT padded: Pallas handles the
    # partial last block (masked stores, per-token-independent compute).
    tn = min(_round_up(tn_max, 128), _round_up(N, 128))
    while B * _cdiv(N, tn) < 4 and tn > 128:
        tn = max(128, _round_up(tn // 2, 128))
    grid = (B, _cdiv(N, tn))

    wt = weight.T.astype(x.dtype)                    # (D, d_model): one-time tiny transpose
    b2 = bias.reshape(1, d_model).astype(x.dtype)    # (1, d_model)

    # VMEM footprint: pipeline double-buffers for every operand (constant
    # index_maps still get buffers), with (8,128) layout padding.
    itemsize = jnp.dtype(x.dtype).itemsize
    dml = _round_up(d_model, 128)
    vmem_need = 2 * itemsize * (
        tn * _round_up(D, 128)        # x tile
        + tn * dml                    # out tile
        + _round_up(D, 8) * dml       # weight^T
        + 8 * dml                     # bias
    )
    vmem_limit = int(min(48 * 1024 * 1024, max(32 * 1024 * 1024, 2 * vmem_need)))

    out = pl.pallas_call(
        _proj_sigmoid_kernel,
        out_shape=jax.ShapeDtypeStruct((B, N, d_model), x.dtype),
        grid_spec=pltpu.PrefetchScalarGridSpec(
            num_scalar_prefetch=0,
            grid=grid,
            in_specs=[
                pl.BlockSpec((None, tn, D), lambda b, i: (b, i, 0)),   # x token tile
                pl.BlockSpec((D, d_model), lambda b, i: (0, 0)),       # weight^T (resident)
                pl.BlockSpec((1, d_model), lambda b, i: (0, 0)),       # bias     (resident)
            ],
            out_specs=pl.BlockSpec((None, tn, d_model), lambda b, i: (b, i, 0)),
        ),
        compiler_params=pltpu.CompilerParams(
            dimension_semantics=("parallel", "parallel"),
            vmem_limit_bytes=vmem_limit,
        ),
    )(x, wt, b2)

    # 'b (h w) n -> b n h w'.  Output traffic is d_model/D (~0.3% at d_model=1)
    # of the input traffic, so this wrapper-side rearrange is negligible.
    masks = out.reshape(B, GS, N // GS, d_model)
    return jnp.transpose(masks, (0, 3, 1, 2))


def _reference(x, weight, bias, im_size, patch_size=1):
    H, W = im_size
    GS = H // patch_size
    B, N, D = x.shape
    d_model = weight.shape[0]
    y = jnp.einsum('bnd,md->bnm', x, weight) + bias   # nn.Linear
    y = y.reshape(B, GS, N // GS, d_model)
    y = jnp.transpose(y, (0, 3, 1, 2))
    return jax.nn.sigmoid(y)


if __name__ == "__main__":
    key = jax.random.PRNGKey(0)
    k_x, k_w, k_b, k_x2 = jax.random.split(key, 4)

    # Case 1: module defaults — d_encoder=384, d_model=1, patch_size=1,
    #         16x16 token grid -> 256 tokens, batch=2.
    B, H, W = 2, 16, 16
    d_encoder, d_model, patch_size = 384, 1, 1
    N = H * W

    x = jax.random.normal(k_x, (B, N, d_encoder), dtype=jnp.float32)
    weight = jax.random.normal(k_w, (d_model, d_encoder), dtype=jnp.float32) * 0.02
    bias = jax.random.normal(k_b, (d_model,), dtype=jnp.float32) * 0.01

    out = mask_transformer2_forward(x, weight, bias, (H, W), patch_size)
    out = jax.block_until_ready(out)
    ref = _reference(x, weight, bias, (H, W), patch_size)
    assert out.shape == (B, d_model, H // patch_size, N // (H // patch_size))
    assert jnp.allclose(out, ref, atol=1e-5, rtol=1e-5), "mismatch vs reference (case 1)"

    # Case 2: non-tile-multiple token count (30x30 -> 900 tokens) to exercise
    # the partial last block path (no wrapper-side padding / slicing).
    H2, W2 = 30, 30
    N2 = H2 * W2
    x2 = jax.random.normal(k_x2, (B, N2, d_encoder), dtype=jnp.float32)
    out2 = mask_transformer2_forward(x2, weight, bias, (H2, W2), patch_size)
    out2 = jax.block_until_ready(out2)
    ref2 = _reference(x2, weight, bias, (H2, W2), patch_size)
    assert out2.shape == (B, d_model, H2 // patch_size, N2 // (H2 // patch_size))
    assert jnp.allclose(out2, ref2, atol=1e-5, rtol=1e-5), "mismatch vs reference (case 2)"

    print("KERNEL_OK")
</pallas_src>

<mosaic_0001>
module attributes {stable_mosaic.version = 11 : i64} {
  func.func @_proj_sigmoid_kernel(%arg0: i32, %arg1: i32, %arg2: memref<1x128x384xf32, #tpu.memory_space<vmem>>, %arg3: memref<384x1xf32, #tpu.memory_space<vmem>>, %arg4: memref<1x1xf32, #tpu.memory_space<vmem>>, %arg5: memref<1x128x1xf32, #tpu.memory_space<vmem>>) attributes {dimension_semantics = [#tpu.dimension_semantics<parallel>, #tpu.dimension_semantics<parallel>], iteration_bounds = array<i64: 2, 2>, scalar_prefetch = 0 : i64, scratch_operands = 0 : i64, tpu.core_type = #tpu.core_type<tc>, window_params = [{transform_indices = @transform_0, window_bounds = array<i64: 1, 128, 384>}, {pipeline_mode = #tpu.pipeline_mode<synchronous>, transform_indices = @transform_1, window_bounds = array<i64: 384, 1>}, {pipeline_mode = #tpu.pipeline_mode<synchronous>, transform_indices = @transform_2, window_bounds = array<i64: 1, 1>}, {transform_indices = @transform_3, window_bounds = array<i64: 1, 128, 1>}]} {
    %c0 = arith.constant 0 : index
    %c0_0 = arith.constant 0 : index
    %c0_1 = arith.constant 0 : index
    %0 = vector.load %arg2[%c0, %c0_0, %c0_1] : memref<1x128x384xf32, #tpu.memory_space<vmem>>, vector<1x128x384xf32>
    %1 = vector.shape_cast %0 : vector<1x128x384xf32> to vector<128x384xf32>
    %c0_2 = arith.constant 0 : index
    %c0_3 = arith.constant 0 : index
    %2 = vector.load %arg3[%c0_2, %c0_3] : memref<384x1xf32, #tpu.memory_space<vmem>>, vector<384x1xf32>
    %cst = arith.constant dense<0.000000e+00> : vector<128x1xf32>
    %3 = tpu.matmul %1, %2, %cst {dimension_numbers = #tpu.dot_dimension_numbers<[1], [0], [0], [1], [0, 0, 1, 1], [], []>} : vector<128x384xf32>, vector<384x1xf32>, vector<128x1xf32> -> vector<128x1xf32>
    %c0_4 = arith.constant 0 : index
    %c0_5 = arith.constant 0 : index
    %4 = vector.load %arg4[%c0_4, %c0_5] : memref<1x1xf32, #tpu.memory_space<vmem>>, vector<1x1xf32>
    %5 = vector.broadcast %4 : vector<1x1xf32> to vector<128x1xf32>
    %6 = arith.addf %3, %5 : vector<128x1xf32>
    %7 = arith.negf %6 : vector<128x1xf32>
    %8 = math.exp %7 : vector<128x1xf32>
    %cst_6 = arith.constant 1.000000e+00 : f32
    %9 = vector.broadcast %cst_6 : f32 to vector<128x1xf32>
    %10 = arith.addf %9, %8 : vector<128x1xf32>
    %11 = arith.divf %9, %10 : vector<128x1xf32>
    %c0_7 = arith.constant 0 : index
    %c0_8 = arith.constant 0 : index
    %c0_9 = arith.constant 0 : index
    %12 = vector.load %arg5[%c0_7, %c0_8, %c0_9] : memref<1x128x1xf32, #tpu.memory_space<vmem>>, vector<1x128x1xf32>
    %13 = vector.shape_cast %12 : vector<1x128x1xf32> to vector<128x1xf32>
    %14 = vector.shape_cast %11 : vector<128x1xf32> to vector<1x128x1xf32>
    tpu.vector_store %arg5[%c0_7, %c0_8, %c0_9], %14 {strides = array<i32>} : memref<1x128x1xf32, #tpu.memory_space<vmem>>, vector<1x128x1xf32>,
    return
  }
  func.func @transform_0(%arg0: i32, %arg1: i32) -> (i32, i32, i32) {
    %c0_i32 = arith.constant 0 : i32
    %c0_i32_0 = arith.constant 0 : i32
    return %arg0, %arg1, %c0_i32 : i32, i32, i32
  }
  func.func @transform_1(%arg0: i32, %arg1: i32) -> (i32, i32) {
    %c0_i32 = arith.constant 0 : i32
    %c0_i32_0 = arith.constant 0 : i32
    %c0_i32_1 = arith.constant 0 : i32
    return %c0_i32, %c0_i32_0 : i32, i32
  }
  func.func @transform_2(%arg0: i32, %arg1: i32) -> (i32, i32) {
    %c0_i32 = arith.constant 0 : i32
    %c0_i32_0 = arith.constant 0 : i32
    %c0_i32_1 = arith.constant 0 : i32
    return %c0_i32, %c0_i32_0 : i32, i32
  }
  func.func @transform_3(%arg0: i32, %arg1: i32) -> (i32, i32, i32) {
    %c0_i32 = arith.constant 0 : i32
    %c0_i32_0 = arith.constant 0 : i32
    return %arg0, %arg1, %c0_i32 : i32, i32, i32
  }
}

</mosaic_0001>

<llo_original>
// kernel: tpu_custom_call.1
$region0: #{tpu_custom_call.1}
  #allocation0 [shape = 'u32[]', space=smem, size = 0x4, offset = 0x4, fixed_abs, tag = 'smem constant byte address 0x4 - core index']
  #allocation1 [shape = 'u32[144,128]{1,0:T(1,128)}', space=vmem, size = 0x12000, scoped, tag = 'internal scratch']
  #allocation2 [shape = 'f32[1,1]{1,0:T(1,128)S(1)}', space=vmem, size = 0x200, scoped, tag = 'scoped memory for tpu_custom_call.1']
  %s0 = inlined_call_operand.hbm [shape: f32[2,256,384], index: 0, kind: input, shape index: {}]
  %s1 = inlined_call_operand.vmem [shape: f32[384,1], index: 1, kind: input, shape index: {}]
  %s2 = inlined_call_operand.<no memory space> [shape: f32[1,1], index: 2, kind: input, shape index: {}]
  %s3 = inlined_call_operand.vmem [shape: f32[2,256,1], index: 3, kind: output, shape index: {}]
  %s4 = sld [smem:[#allocation0]]
  $region49: #{tpu_custom_call.1} parent=0
    _
  %s6 = ssub.s32 1, %s4
  %s7 = scalar_select 0, %s6, %s4
  %v8 = vstv %s2
  %9 = vst [vmem:[#allocation2] sm:$0x1] %v8
  $region1: #{tpu_custom_call.1} parent=0
    #allocation3 [shape = 'u8[393216]{0}', space=vmem, size = 0x60000, scoped, tag = 'input window, operand 0']
    #allocation4 [shape = 's32[2]{0}', space=sflag, size = 0x8, scoped, tag = 'scoped memory for tpu_custom_call.1']
    %10 = vsyncpa [#allocation4], 0
    %s11 = scalar_lea.sflag [#allocation4], 1
    %12 = vsyncpa %s11, 0
    loop: start=0, step=1, limit=6
    $region2: #{tpu_custom_call.1} parent=1 // loop_pre_header
      _
    $region3: #{tpu_custom_call.1} parent=1 // loop_header
      %s14 = sphi 0, %s18
      %p15 = scmp.ge.s32.totalorder %s14, 6
      %s21 = sphi 0, %s33
      %s22 = sphi 0, %s29
      %s23 = sphi 0, %s21
      %s24 = sphi 0, %s22
      %s25 = sphi 0, %s23
      %s26 = sphi 0, %s24
      %s38 = sphi 0, %s40
      %s41 = sphi 0, %s38
      %s42 = sphi 0, %s41
      %s58 = sphi 0, %s42
      %s62 = sphi 0, %s62
      %s64 = sphi 0, %s62
      %s65 = sphi 0, %s64
      %s79 = sphi 0, %s65
      %s83 = sphi 0, %s83
      %s85 = sphi 0, %s83
      %s86 = sphi 0, %s85
      %s100 = sphi 0, %s86
      %s108 = sphi 0, %s110
      %s111 = sphi 0, %s108
      %s112 = sphi 0, %s111
      %s128 = sphi 0, %s112
    $region4: #{tpu_custom_call.1} parent=1 // loop_header_branch
      %17 = sbr.rel (%p15) target = $region8
    $region5: #{tpu_custom_call.1} parent=1 // loop_body
      %s19 = ssub.s32 %s14, 1
      %s20 = ssub.s32 %s14, 2
      %s27 = sadd.s32 1, %s22
      %p28 = scmp.ge.s32.totalorder %s27, 2
      %s29 = scalar_select %p28, 0, %s27
      %s30 = sadd.s32 1, %s21
      %s31 = scalar_select %p28, %s30, %s21
      %p32 = scmp.ge.s32.totalorder %s31, 2
      %s33 = scalar_select %p32, 0, %s31
      %s34 = ssub.s32 %s21, %s33
      %s35 = ssub.s32 %s22, %s29
      %s36 = sor.u32 %s34, %s35
      %p37 = scmp.eq.s32.totalorder %s36, 0
      %s39 = sadd.s32 %s38, 1
      %s40 = scalar_select %p37, %s38, %s39
      %p43 = pneg %p37
      %p44 = scmp.eq.s32.totalorder %s14, 3
      %p45 = por %p43, %p44
      %p46 = scmp.ne.s32.totalorder %s38, %s41
      %p47 = scmp.eq.s32.totalorder %s14, 0
      %p48 = por %p46, %p47
      %p49 = scmp.ne.s32.totalorder %s38, %s41
      %p50 = scmp.eq.s32.totalorder %s19, 3
      %p51 = por %p49, %p50
      %p52 = scmp.ne.s32.totalorder %s41, %s42
      %p53 = scmp.eq.s32.totalorder %s19, 0
      %p54 = por %p52, %p53
      %p55 = scmp.ne.s32.totalorder %s41, %s42
      %p56 = scmp.eq.s32.totalorder %s20, 3
      %p57 = por %p55, %p56
      %p59 = scmp.ne.s32.totalorder %s42, %s58
      %p60 = scmp.eq.s32.totalorder %s20, 0
      %p61 = por %p59, %p60
      %s63 = sadd.s32 %s62, 1
      %p66 = scmp.eq.s32.totalorder %s14, 3
      %p67 = scmp.ne.s32.totalorder %s62, %s64
      %p68 = scmp.eq.s32.totalorder %s14, 0
      %p69 = por %p67, %p68
      %p70 = scmp.ne.s32.totalorder %s62, %s64
      %p71 = scmp.eq.s32.totalorder %s19, 3
      %p72 = por %p70, %p71
      %p73 = scmp.ne.s32.totalorder %s64, %s65
      %p74 = scmp.eq.s32.totalorder %s19, 0
      %p75 = por %p73, %p74
      %p76 = scmp.ne.s32.totalorder %s64, %s65
      %p77 = scmp.eq.s32.totalorder %s20, 3
      %p78 = por %p76, %p77
      %p80 = scmp.ne.s32.totalorder %s65, %s79
      %p81 = scmp.eq.s32.totalorder %s20, 0
      %p82 = por %p80, %p81
      %s84 = sadd.s32 %s83, 1
      %p87 = scmp.eq.s32.totalorder %s14, 3
      %p88 = scmp.ne.s32.totalorder %s83, %s85
      %p89 = scmp.eq.s32.totalorder %s14, 0
      %p90 = por %p88, %p89
      %p91 = scmp.ne.s32.totalorder %s83, %s85
      %p92 = scmp.eq.s32.totalorder %s19, 3
      %p93 = por %p91, %p92
      %p94 = scmp.ne.s32.totalorder %s85, %s86
      %p95 = scmp.eq.s32.totalorder %s19, 0
      %p96 = por %p94, %p95
      %p97 = scmp.ne.s32.totalorder %s85, %s86
      %p98 = scmp.eq.s32.totalorder %s20, 3
      %p99 = por %p97, %p98
      %p101 = scmp.ne.s32.totalorder %s86, %s100
      %p102 = scmp.eq.s32.totalorder %s20, 0
      %p103 = por %p101, %p102
      %s104 = ssub.s32 %s21, %s33
      %s105 = ssub.s32 %s22, %s29
      %s106 = sor.u32 %s104, %s105
      %p107 = scmp.eq.s32.totalorder %s106, 0
      %s109 = sadd.s32 %s108, 1
      %s110 = scalar_select %p107, %s108, %s109
      %p113 = pneg %p107
      %p114 = scmp.eq.s32.totalorder %s14, 3
      %p115 = por %p113, %p114
      %p116 = scmp.ne.s32.totalorder %s108, %s111
      %p117 = scmp.eq.s32.totalorder %s14, 0
      %p118 = por %p116, %p117
      %p119 = scmp.ne.s32.totalorder %s108, %s111
      %p120 = scmp.eq.s32.totalorder %s19, 3
      %p121 = por %p119, %p120
      %p122 = scmp.ne.s32.totalorder %s111, %s112
      %p123 = scmp.eq.s32.totalorder %s19, 0
      %p124 = por %p122, %p123
      %p125 = scmp.ne.s32.totalorder %s111, %s112
      %p126 = scmp.eq.s32.totalorder %s20, 3
      %p127 = por %p125, %p126
      %p129 = scmp.ne.s32.totalorder %s112, %s128
      %p130 = scmp.eq.s32.totalorder %s20, 0
      %p131 = por %p129, %p130
      %p132 = scmp.le.s32.totalorder 1, %s14
      %p133 = scmp.lt.s32.totalorder %s14, 5
      %p134 = pnand %p132, %p133
      %p135 = pneg %p134
      // Predicated region
      $region9: #{tpu_custom_call.1} parent=5 // pred_check
        _
      $region10: #{tpu_custom_call.1} parent=5 // pred_check_branch
        %137 = sbr.rel (%p134) target = $region12
      $region11: #{tpu_custom_call.1} parent=5 // pred_region
        %s138 = ssub.s32 %s14, 1
        // Predicated region
        $region13: #{tpu_custom_call.1} parent=11 // pred_check
          %p139 = pneg %p75
        $region14: #{tpu_custom_call.1} parent=11 // pred_check_branch
          %141 = sbr.rel (%p139) target = $region16
        $region15: #{tpu_custom_call.1} parent=11 // pred_region
          _
        $region16: #{tpu_custom_call.1} parent=11 // pred_fallthru
          _
        // Predicated region
        $region17: #{tpu_custom_call.1} parent=11 // pred_check
          %p142 = pneg %p96
        $region18: #{tpu_custom_call.1} parent=11 // pred_check_branch
          %144 = sbr.rel (%p142) target = $region20
        $region19: #{tpu_custom_call.1} parent=11 // pred_region
          _
        $region20: #{tpu_custom_call.1} parent=11 // pred_fallthru
          _
      $region12: #{tpu_custom_call.1} parent=5 // pred_fallthru
        _
      %p145 = scmp.lt.s32.totalorder %s14, 4
      // Predicated region
      $region21: #{tpu_custom_call.1} parent=5 // pred_check
        %p146 = pneg %p145
      $region22: #{tpu_custom_call.1} parent=5 // pred_check_branch
        %148 = sbr.rel (%p146) target = $region24
      $region23: #{tpu_custom_call.1} parent=5 // pred_region
        // Predicated region
        $region25: #{tpu_custom_call.1} parent=23 // pred_check
          %p149 = pneg %p48
        $region26: #{tpu_custom_call.1} parent=23 // pred_check_branch
          %151 = sbr.rel (%p149) target = $region28
        $region27: #{tpu_custom_call.1} parent=23 // pred_region
          %s152 = sand.u32 %s38, 1
          %s153 = scalar_lea.sflag [#allocation4], %s152
          %s154 = sand.u32 %s38, 1
          %s155 = smul.addr %s154, 384
          %s156 = scalar_lea.vmem [#allocation3], %s155
          %s157 = smul.u32 16, %s22
          %s159 = ssub.s32 6144, 6144
          %160 = vsyncadd %s153, %s159
          %s161 = smul.addr %s157, 3
          %s162 = smul.addr %s21, 96
          %s163 = sadd.s32 %s161, %s162
          %s164 = smul.addr %s163, 128
          %s165 = scalar_lea.hbm %s0, %s164
          %s166 = sshll.u32 %s156, 4
          %s167 = int_to_ptr.vmem [resolvable:$true] %s166
          %172 = dma.hbm_to_vmem [thread:$0]  %s165, 6144, %s167, %s153, 384, 384, 24
        $region28: #{tpu_custom_call.1} parent=23 // pred_fallthru
          _
      $region24: #{tpu_custom_call.1} parent=5 // pred_fallthru
        _
      %p173 = scmp.le.s32.totalorder 1, %s14
      %p174 = scmp.lt.s32.totalorder %s14, 5
      %p175 = pnand %p173, %p174
      %p176 = pneg %p175
      // Predicated region
      $region29: #{tpu_custom_call.1} parent=5 // pred_check
        _
      $region30: #{tpu_custom_call.1} parent=5 // pred_check_branch
        %178 = sbr.rel (%p175) target = $region32
      $region31: #{tpu_custom_call.1} parent=5 // pred_region
        %s179 = ssub.s32 %s14, 1
        %s180 = sand.u32 %s41, 1
        %s181 = scalar_lea.sflag [#allocation4], %s180
        %s182 = sand.u32 %s41, 1
        %s183 = smul.addr %s182, 384
        %s184 = scalar_lea.vmem [#allocation3], %s183
        // Predicated region
        $region33: #{tpu_custom_call.1} parent=31 // pred_check
          %p185 = pneg %p54
        $region34: #{tpu_custom_call.1} parent=31 // pred_check_branch
          %187 = sbr.rel (%p185) target = $region36
        $region35: #{tpu_custom_call.1} parent=31 // pred_region
          %188 = dma.done %s181, 6144
        $region36: #{tpu_custom_call.1} parent=31 // pred_fallthru
          _
        %s189 = sand.u32 %s41, 1
        %s190 = scalar_lea.sflag [#allocation4], %s189
        %s191 = sand.u32 %s41, 1
        %s192 = smul.addr %s191, 384
        %s193 = scalar_lea.vmem [#allocation3], %s192
        %p194 = pneg %p54
        %p195 = pneg %p51
        %p196 = pneg %p75
        %p197 = pneg %p72
        %p198 = pneg %p96
        %p199 = pneg %p93
        %p200 = pneg %p124
        %p201 = pneg %p121
        %s202 = smul.u32 16, %s24
        %p203 = scmp.lt.s32.totalorder %s23, 1
        %s204 = scalar_select %p203, %s23, 1
        %p205 = scmp.lt.s32.totalorder %s202, 31
        %s206 = scalar_select %p205, %s202, 31
        %s207 = smul.addr %s204, 32
        %s208 = sadd.s32 %s206, %s207
        %s209 = smul.addr %s208, 8
        %s210 = scalar_lea.vmem %s3, %s209
        %s211 = smul.u32 16, %s24
        %s212 = smul.u32 16, %s24
        %p213 = scmp.lt.s32.totalorder %s23, 1
        %s214 = scalar_select %p213, %s23, 1
        %p215 = scmp.lt.s32.totalorder %s212, 31
        %s216 = scalar_select %p215, %s212, 31
        %s217 = smul.addr %s214, 32
        %s218 = sadd.s32 %s216, %s217
        %s219 = smul.addr %s218, 8
        %s220 = scalar_lea.vmem %s3, %s219
        %s221 = smul.u32 16, %s24
        %v222 = vld [vmem:[%s184] sm:$0xff]
        %v223 = vld [vmem:[%s184 + $0x8] sm:$0xff]
        %v224 = vld [vmem:[%s184 + $0x10] sm:$0xff]
        %v225 = vld [vmem:[%s184 + $0x18] sm:$0xff]
        %v226 = vld [vmem:[%s184 + $0x20] sm:$0xff]
        %v227 = vld [vmem:[%s184 + $0x28] sm:$0xff]
        %v228 = vld [vmem:[%s184 + $0x30] sm:$0xff]
        %v229 = vld [vmem:[%s184 + $0x38] sm:$0xff]
        %v230 = vld [vmem:[%s184 + $0x40] sm:$0xff]
        %v231 = vld [vmem:[%s184 + $0x48] sm:$0xff]
        %v232 = vld [vmem:[%s184 + $0x50] sm:$0xff]
        %v233 = vld [vmem:[%s184 + $0x58] sm:$0xff]
        %v234 = vld [vmem:[%s184 + $0x60] sm:$0xff]
        %v235 = vld [vmem:[%s184 + $0x68] sm:$0xff]
        %v236 = vld [vmem:[%s184 + $0x70] sm:$0xff]
        %v237 = vld [vmem:[%s184 + $0x78] sm:$0xff]
        %v238 = vld [vmem:[%s184 + $0x80] sm:$0xff]
        %v239 = vld [vmem:[%s184 + $0x88] sm:$0xff]
        %v240 = vld [vmem:[%s184 + $0x90] sm:$0xff]
        %v241 = vld [vmem:[%s184 + $0x98] sm:$0xff]
        %v242 = vld [vmem:[%s184 + $0xa0] sm:$0xff]
        %v243 = vld [vmem:[%s184 + $0xa8] sm:$0xff]
        %v244 = vld [vmem:[%s184 + $0xb0] sm:$0xff]
        %v245 = vld [vmem:[%s184 + $0xb8] sm:$0xff]
        %v246 = vld [vmem:[%s184 + $0xc0] sm:$0xff]
        %v247 = vld [vmem:[%s184 + $0xc8] sm:$0xff]
        %v248 = vld [vmem:[%s184 + $0xd0] sm:$0xff]
        %v249 = vld [vmem:[%s184 + $0xd8] sm:$0xff]
        %v250 = vld [vmem:[%s184 + $0xe0] sm:$0xff]
        %v251 = vld [vmem:[%s184 + $0xe8] sm:$0xff]
        %v252 = vld [vmem:[%s184 + $0xf0] sm:$0xff]
        %v253 = vld [vmem:[%s184 + $0xf8] sm:$0xff]
        %v254 = vld [vmem:[%s184 + $0x100] sm:$0xff]
        %v255 = vld [vmem:[%s184 + $0x108] sm:$0xff]
        %v256 = vld [vmem:[%s184 + $0x110] sm:$0xff]
        %v257 = vld [vmem:[%s184 + $0x118] sm:$0xff]
        %v258 = vld [vmem:[%s184 + $0x120] sm:$0xff]
        %v259 = vld [vmem:[%s184 + $0x128] sm:$0xff]
        %v260 = vld [vmem:[%s184 + $0x130] sm:$0xff]
        %v261 = vld [vmem:[%s184 + $0x138] sm:$0xff]
        %v262 = vld [vmem:[%s184 + $0x140] sm:$0xff]
        %v263 = vld [vmem:[%s184 + $0x148] sm:$0xff]
        %v264 = vld [vmem:[%s184 + $0x150] sm:$0xff]
        %v265 = vld [vmem:[%s184 + $0x158] sm:$0xff]
        %v266 = vld [vmem:[%s184 + $0x160] sm:$0xff]
        %v267 = vld [vmem:[%s184 + $0x168] sm:$0xff]
        %v268 = vld [vmem:[%s184 + $0x170] sm:$0xff]
        %v269 = vld [vmem:[%s184 + $0x178] sm:$0xff]
        %v270 = vld [vmem:[%s1] sm:$0xff]
        %v271 = vld [vmem:[%s1 + $0x8] sm:$0xff]
        %v272 = vld [vmem:[%s1 + $0x10] sm:$0xff]
        %v273 = vld [vmem:[%s1 + $0x18] sm:$0xff]
        %v274 = vld [vmem:[%s1 + $0x20] sm:$0xff]
        %v275 = vld [vmem:[%s1 + $0x28] sm:$0xff]
        %v276 = vld [vmem:[%s1 + $0x30] sm:$0xff]
        %v277 = vld [vmem:[%s1 + $0x38] sm:$0xff]
        %v278 = vld [vmem:[%s1 + $0x40] sm:$0xff]
        %v279 = vld [vmem:[%s1 + $0x48] sm:$0xff]
        %v280 = vld [vmem:[%s1 + $0x50] sm:$0xff]
        %v281 = vld [vmem:[%s1 + $0x58] sm:$0xff]
        %v282 = vld [vmem:[%s1 + $0x60] sm:$0xff]
        %v283 = vld [vmem:[%s1 + $0x68] sm:$0xff]
        %v284 = vld [vmem:[%s1 + $0x70] sm:$0xff]
        %v285 = vld [vmem:[%s1 + $0x78] sm:$0xff]
        %v286 = vld [vmem:[%s1 + $0x80] sm:$0xff]
        %v287 = vld [vmem:[%s1 + $0x88] sm:$0xff]
        %v288 = vld [vmem:[%s1 + $0x90] sm:$0xff]
        %v289 = vld [vmem:[%s1 + $0x98] sm:$0xff]
        %v290 = vld [vmem:[%s1 + $0xa0] sm:$0xff]
        %v291 = vld [vmem:[%s1 + $0xa8] sm:$0xff]
        %v292 = vld [vmem:[%s1 + $0xb0] sm:$0xff]
        %v293 = vld [vmem:[%s1 + $0xb8] sm:$0xff]
        %v294 = vld [vmem:[%s1 + $0xc0] sm:$0xff]
        %v295 = vld [vmem:[%s1 + $0xc8] sm:$0xff]
        %v296 = vld [vmem:[%s1 + $0xd0] sm:$0xff]
        %v297 = vld [vmem:[%s1 + $0xd8] sm:$0xff]
        %v298 = vld [vmem:[%s1 + $0xe0] sm:$0xff]
        %v299 = vld [vmem:[%s1 + $0xe8] sm:$0xff]
        %v300 = vld [vmem:[%s1 + $0xf0] sm:$0xff]
        %v301 = vld [vmem:[%s1 + $0xf8] sm:$0xff]
        %v302 = vld [vmem:[%s1 + $0x100] sm:$0xff]
        %v303 = vld [vmem:[%s1 + $0x108] sm:$0xff]
        %v304 = vld [vmem:[%s1 + $0x110] sm:$0xff]
        %v305 = vld [vmem:[%s1 + $0x118] sm:$0xff]
        %v306 = vld [vmem:[%s1 + $0x120] sm:$0xff]
        %v307 = vld [vmem:[%s1 + $0x128] sm:$0xff]
        %v308 = vld [vmem:[%s1 + $0x130] sm:$0xff]
        %v309 = vld [vmem:[%s1 + $0x138] sm:$0xff]
        %v310 = vld [vmem:[%s1 + $0x140] sm:$0xff]
        %v311 = vld [vmem:[%s1 + $0x148] sm:$0xff]
        %v312 = vld [vmem:[%s1 + $0x150] sm:$0xff]
        %v313 = vld [vmem:[%s1 + $0x158] sm:$0xff]
        %v314 = vld [vmem:[%s1 + $0x160] sm:$0xff]
        %v315 = vld [vmem:[%s1 + $0x168] sm:$0xff]
        %v316 = vld [vmem:[%s1 + $0x170] sm:$0xff]
        %v317 = vld [vmem:[%s1 + $0x178] sm:$0xff]
        %v318 = vld [vmem:[#allocation2] sm:$0x1]
        %v320 = vlaneseq
        %v321 = vshrl.u32 %v320, 7
        %v322 = vsub.s32 0, %v321
        %v323 = vrot.slane %v318, %v322
        %325 = vmatprep.subr.mxu0 0.0
        %326 = vmatpush1.msra.mxu0 %v270
        %327 = vmatprep.subr.mxu0 0.0
        %328 = vmatpush1.msra.mxu0 %v271
        %329 = vmatprep.subr.mxu0 0.0
        %330 = vmatpush1.msra.mxu0 %v272
        %331 = vmatprep.subr.mxu0 0.0
        %332 = vmatpush1.msra.mxu0 %v273
        %333 = vmatprep.subr.mxu0 0.0
        %334 = vmatpush1.msra.mxu0 %v274
        %335 = vmatprep.subr.mxu0 0.0
        %336 = vmatpush1.msra.mxu0 %v275
        %337 = vmatprep.subr.mxu0 0.0
        %338 = vmatpush1.msra.mxu0 %v276
        %339 = vmatprep.subr.mxu0 0.0
        %340 = vmatpush1.msra.mxu0 %v277
        %341 = vmatprep.subr.mxu0 0.0
        %342 = vmatpush1.msra.mxu0 %v278
        %343 = vmatprep.subr.mxu0 0.0
        %344 = vmatpush1.msra.mxu0 %v279
        %345 = vmatprep.subr.mxu0 0.0
        %346 = vmatpush1.msra.mxu0 %v280
        %347 = vmatprep.subr.mxu0 0.0
        %348 = vmatpush1.msra.mxu0 %v281
        %349 = vmatprep.subr.mxu0 0.0
        %350 = vmatpush1.msra.mxu0 %v282
        %351 = vmatprep.subr.mxu0 0.0
        %352 = vmatpush1.msra.mxu0 %v283
        %353 = vmatprep.subr.mxu0 0.0
        %354 = vmatpush1.msra.mxu0 %v284
        %355 = vmatprep.subr.mxu0 0.0
        %356 = vmatpush1.msra.mxu0 %v285
        %357 = vmatprep.subr.mxu0 0.0
        %358 = vmatpush1.msra.mxu0 %v286
        %359 = vmatprep.subr.mxu0 0.0
        %360 = vmatpush1.msra.mxu0 %v287
        %361 = vmatprep.subr.mxu0 0.0
        %362 = vmatpush1.msra.mxu0 %v288
        %363 = vmatprep.subr.mxu0 0.0
        %364 = vmatpush1.msra.mxu0 %v289
        %365 = vmatprep.subr.mxu0 0.0
        %366 = vmatpush1.msra.mxu0 %v290
        %367 = vmatprep.subr.mxu0 0.0
        %368 = vmatpush1.msra.mxu0 %v291
        %369 = vmatprep.subr.mxu0 0.0
        %370 = vmatpush1.msra.mxu0 %v292
        %371 = vmatprep.subr.mxu0 0.0
        %372 = vmatpush1.msra.mxu0 %v293
        %373 = vmatprep.subr.mxu0 0.0
        %374 = vmatpush1.msra.mxu0 %v294
        %375 = vmatprep.subr.mxu0 0.0
        %376 = vmatpush1.msra.mxu0 %v295
        %377 = vmatprep.subr.mxu0 0.0
        %378 = vmatpush1.msra.mxu0 %v296
        %379 = vmatprep.subr.mxu0 0.0
        %380 = vmatpush1.msra.mxu0 %v297
        %381 = vmatprep.subr.mxu0 0.0
        %382 = vmatpush1.msra.mxu0 %v298
        %383 = vmatprep.subr.mxu0 0.0
        %384 = vmatpush1.msra.mxu0 %v299
        %385 = vmatprep.subr.mxu0 0.0
        %386 = vmatpush1.msra.mxu0 %v300
        %387 = vmatprep.subr.mxu0 0.0
        %388 = vmatpush1.msra.mxu0 %v301
        %389 = vmatprep.mubr.f32.mxu0 %v223
        %390 = vmatmul.mubr.f32.gmra.mrb[0].mxu0 %v222
        %v391 = vpop.f32.mrb[0].mxu0
        %v392 = vadd.f32 %v323, %v391
        %v393 = vpop.f32.mrb[0].mxu0
        %394 = vmatprep.mubr.f32.mxu0 %v226
        %395 = vmatmul.mubr.f32.gmra.mrb[0].mxu0 %v225
        %v396 = vpop.f32.mrb[0].mxu0
        %v397 = vadd.f32 %v323, %v396
        %v398 = vpop.f32.mrb[0].mxu0
        %399 = vmatprep.mubr.f32.mxu0 %v229
        %400 = vmatmul.mubr.f32.gmra.mrb[0].mxu0 %v228
        %v401 = vpop.f32.mrb[0].mxu0
        %v402 = vadd.f32 %v323, %v401
        %v403 = vpop.f32.mrb[0].mxu0
        %404 = vmatprep.mubr.f32.mxu0 %v232
        %405 = vmatmul.mubr.f32.gmra.mrb[0].mxu0 %v231
        %v406 = vpop.f32.mrb[0].mxu0
        %v407 = vadd.f32 %v323, %v406
        %v408 = vpop.f32.mrb[0].mxu0
        %409 = vmatprep.mubr.f32.mxu0 %v235
        %410 = vmatmul.mubr.f32.gmra.mrb[0].mxu0 %v234
        %v411 = vpop.f32.mrb[0].mxu0
        %v412 = vadd.f32 %v323, %v411
        %v413 = vpop.f32.mrb[0].mxu0
        %414 = vmatprep.mubr.f32.mxu0 %v238
        %415 = vmatmul.mubr.f32.gmra.mrb[0].mxu0 %v237
        %v416 = vpop.f32.mrb[0].mxu0
        %v417 = vadd.f32 %v323, %v416
        %v418 = vpop.f32.mrb[0].mxu0
        %419 = vmatprep.mubr.f32.mxu0 %v241
        %420 = vmatmul.mubr.f32.gmra.mrb[0].mxu0 %v240
        %v421 = vpop.f32.mrb[0].mxu0
        %v422 = vadd.f32 %v323, %v421
        %v423 = vpop.f32.mrb[0].mxu0
        %424 = vmatprep.mubr.f32.mxu0 %v244
        %425 = vmatmul.mubr.f32.gmra.mrb[0].mxu0 %v243
        %v426 = vpop.f32.mrb[0].mxu0
        %v427 = vadd.f32 %v323, %v426
        %v428 = vpop.f32.mrb[0].mxu0
        %429 = vmatprep.mubr.f32.mxu0 %v247
        %430 = vmatmul.mubr.f32.gmra.mrb[0].mxu0 %v246
        %v431 = vpop.f32.mrb[0].mxu0
        %v432 = vadd.f32 %v323, %v431
        %v433 = vpop.f32.mrb[0].mxu0
        %434 = vmatprep.mubr.f32.mxu0 %v250
        %435 = vmatmul.mubr.f32.gmra.mrb[0].mxu0 %v249
        %v436 = vpop.f32.mrb[0].mxu0
        %v437 = vadd.f32 %v323, %v436
        %v438 = vpop.f32.mrb[0].mxu0
        %439 = vmatprep.mubr.f32.mxu0 %v253
        %440 = vmatmul.mubr.f32.gmra.mrb[0].mxu0 %v252
        %v441 = vpop.f32.mrb[0].mxu0
        %v442 = vadd.f32 %v323, %v441
        %v443 = vpop.f32.mrb[0].mxu0
        %444 = vmatprep.mubr.f32.mxu0 %v256
        %445 = vmatmul.mubr.f32.gmra.mrb[0].mxu0 %v255
        %v446 = vpop.f32.mrb[0].mxu0
        %v447 = vadd.f32 %v323, %v446
        %v448 = vpop.f32.mrb[0].mxu0
        %449 = vmatprep.mubr.f32.mxu0 %v259
        %450 = vmatmul.mubr.f32.gmra.mrb[0].mxu0 %v258
        %v451 = vpop.f32.mrb[0].mxu0
        %v452 = vadd.f32 %v323, %v451
        %v453 = vpop.f32.mrb[0].mxu0
        %454 = vmatprep.mubr.f32.mxu0 %v262
        %455 = vmatmul.mubr.f32.gmra.mrb[0].mxu0 %v261
        %v456 = vpop.f32.mrb[0].mxu0
        %v457 = vadd.f32 %v323, %v456
        %v458 = vpop.f32.mrb[0].mxu0
        %459 = vmatprep.mubr.f32.mxu0 %v265
        %460 = vmatmul.mubr.f32.gmra.mrb[0].mxu0 %v264
        %v461 = vpop.f32.mrb[0].mxu0
        %v462 = vadd.f32 %v323, %v461
        %v463 = vpop.f32.mrb[0].mxu0
        %464 = vmatprep.mubr.f32.mxu0 %v268
        %465 = vmatmul.mubr.f32.gmra.mrb[0].mxu0 %v267
        %v466 = vpop.f32.mrb[0].mxu0
        %v467 = vadd.f32 %v323, %v466
        %v468 = vpop.f32.mrb[0].mxu0
        %469 = vdwg.mxu0
        %470 = vmatprep.subr.mxu0 0.0
        %471 = vmatpush1.msra.mxu0 %v302
        %472 = vmatprep.subr.mxu0 0.0
        %473 = vmatpush1.msra.mxu0 %v303
        %474 = vmatprep.subr.mxu0 0.0
        %475 = vmatpush1.msra.mxu0 %v304
        %476 = vmatprep.subr.mxu0 0.0
        %477 = vmatpush1.msra.mxu0 %v305
        %478 = vmatprep.subr.mxu0 0.0
        %479 = vmatpush1.msra.mxu0 %v306
        %480 = vmatprep.subr.mxu0 0.0
        %481 = vmatpush1.msra.mxu0 %v307
        %482 = vmatprep.subr.mxu0 0.0
        %483 = vmatpush1.msra.mxu0 %v308
        %484 = vmatprep.subr.mxu0 0.0
        %485 = vmatpush1.msra.mxu0 %v309
        %486 = vmatprep.subr.mxu0 0.0
        %487 = vmatpush1.msra.mxu0 %v310
        %488 = vmatprep.subr.mxu0 0.0
        %489 = vmatpush1.msra.mxu0 %v311
        %490 = vmatprep.subr.mxu0 0.0
        %491 = vmatpush1.msra.mxu0 %v312
        %492 = vmatprep.subr.mxu0 0.0
        %493 = vmatpush1.msra.mxu0 %v313
        %494 = vmatprep.subr.mxu0 0.0
        %495 = vmatpush1.msra.mxu0 %v314
        %496 = vmatprep.subr.mxu0 0.0
        %497 = vmatpush1.msra.mxu0 %v315
        %498 = vmatprep.subr.mxu0 0.0
        %499 = vmatpush1.msra.mxu0 %v316
        %500 = vmatprep.subr.mxu0 0.0
        %501 = vmatpush1.msra.mxu0 %v317
        %502 = vmatprep.subr.mxu0 0.0
        %503 = vmatpush1.msra.mxu0 0.0
        %504 = vmatprep.subr.mxu0 0.0
        %505 = vmatpush1.msra.mxu0 0.0
        %506 = vmatprep.subr.mxu0 0.0
        %507 = vmatpush1.msra.mxu0 0.0
        %508 = vmatprep.subr.mxu0 0.0
        %509 = vmatpush1.msra.mxu0 0.0
        %510 = vmatprep.subr.mxu0 0.0
        %511 = vmatpush1.msra.mxu0 0.0
        %512 = vmatprep.subr.mxu0 0.0
        %513 = vmatpush1.msra.mxu0 0.0
        %514 = vmatprep.subr.mxu0 0.0
        %515 = vmatpush1.msra.mxu0 0.0
        %516 = vmatprep.subr.mxu0 0.0
        %517 = vmatpush1.msra.mxu0 0.0
        %518 = vmatprep.subr.mxu0 0.0
        %519 = vmatpush1.msra.mxu0 0.0
        %520 = vmatprep.subr.mxu0 0.0
        %521 = vmatpush1.msra.mxu0 0.0
        %522 = vmatprep.subr.mxu0 0.0
        %523 = vmatpush1.msra.mxu0 0.0
        %524 = vmatprep.subr.mxu0 0.0
        %525 = vmatpush1.msra.mxu0 0.0
        %526 = vmatprep.subr.mxu0 0.0
        %527 = vmatpush1.msra.mxu0 0.0
        %528 = vmatprep.subr.mxu0 0.0
        %529 = vmatpush1.msra.mxu0 0.0
        %530 = vmatprep.subr.mxu0 0.0
        %531 = vmatpush1.msra.mxu0 0.0
        %532 = vmatprep.subr.mxu0 0.0
        %533 = vmatpush1.msra.mxu0 0.0
        %534 = vmatprep.mubr.f32.mxu0 0.0
        %535 = vmatmul.mubr.f32.gmra.mrb[0].mxu0 %v224
        %v536 = vpop.f32.mrb[0].mxu0
        %v537 = vadd.f32 %v392, %v536
        %v538 = vpop.f32.mrb[0].mxu0
        %539 = vmatprep.mubr.f32.mxu0 0.0
        %540 = vmatmul.mubr.f32.gmra.mrb[0].mxu0 %v227
        %v541 = vpop.f32.mrb[0].mxu0
        %v542 = vadd.f32 %v397, %v541
        %v543 = vpop.f32.mrb[0].mxu0
        %544 = vmatprep.mubr.f32.mxu0 0.0
        %545 = vmatmul.mubr.f32.gmra.mrb[0].mxu0 %v230
        %v546 = vpop.f32.mrb[0].mxu0
        %v547 = vadd.f32 %v402, %v546
        %v548 = vpop.f32.mrb[0].mxu0
        %549 = vmatprep.mubr.f32.mxu0 0.0
        %550 = vmatmul.mubr.f32.gmra.mrb[0].mxu0 %v233
        %v551 = vpop.f32.mrb[0].mxu0
        %v552 = vadd.f32 %v407, %v551
        %v553 = vpop.f32.mrb[0].mxu0
        %554 = vmatprep.mubr.f32.mxu0 0.0
        %555 = vmatmul.mubr.f32.gmra.mrb[0].mxu0 %v236
        %v556 = vpop.f32.mrb[0].mxu0
        %v557 = vadd.f32 %v412, %v556
        %v558 = vpop.f32.mrb[0].mxu0
        %559 = vmatprep.mubr.f32.mxu0 0.0
        %560 = vmatmul.mubr.f32.gmra.mrb[0].mxu0 %v239
        %v561 = vpop.f32.mrb[0].mxu0
        %v562 = vadd.f32 %v417, %v561
        %v563 = vpop.f32.mrb[0].mxu0
        %564 = vmatprep.mubr.f32.mxu0 0.0
        %565 = vmatmul.mubr.f32.gmra.mrb[0].mxu0 %v242
        %v566 = vpop.f32.mrb[0].mxu0
        %v567 = vadd.f32 %v422, %v566
        %v568 = vpop.f32.mrb[0].mxu0
        %569 = vmatprep.mubr.f32.mxu0 0.0
        %570 = vmatmul.mubr.f32.gmra.mrb[0].mxu0 %v245
        %v571 = vpop.f32.mrb[0].mxu0
        %v572 = vadd.f32 %v427, %v571
        %v573 = vpop.f32.mrb[0].mxu0
        %574 = vmatprep.mubr.f32.mxu0 0.0
        %575 = vmatmul.mubr.f32.gmra.mrb[0].mxu0 %v248
        %v576 = vpop.f32.mrb[0].mxu0
        %v577 = vadd.f32 %v432, %v576
        %v578 = vpop.f32.mrb[0].mxu0
        %579 = vmatprep.mubr.f32.mxu0 0.0
        %580 = vmatmul.mubr.f32.gmra.mrb[0].mxu0 %v251
        %v581 = vpop.f32.mrb[0].mxu0
        %v582 = vadd.f32 %v437, %v581
        %v583 = vpop.f32.mrb[0].mxu0
        %584 = vmatprep.mubr.f32.mxu0 0.0
        %585 = vmatmul.mubr.f32.gmra.mrb[0].mxu0 %v254
        %v586 = vpop.f32.mrb[0].mxu0
        %v587 = vadd.f32 %v442, %v586
        %v588 = vpop.f32.mrb[0].mxu0
        %589 = vmatprep.mubr.f32.mxu0 0.0
        %590 = vmatmul.mubr.f32.gmra.mrb[0].mxu0 %v257
        %v591 = vpop.f32.mrb[0].mxu0
        %v592 = vadd.f32 %v447, %v591
        %v593 = vpop.f32.mrb[0].mxu0
        %594 = vmatprep.mubr.f32.mxu0 0.0
        %595 = vmatmul.mubr.f32.gmra.mrb[0].mxu0 %v260
        %v596 = vpop.f32.mrb[0].mxu0
        %v597 = vadd.f32 %v452, %v596
        %v598 = vpop.f32.mrb[0].mxu0
        %599 = vmatprep.mubr.f32.mxu0 0.0
        %600 = vmatmul.mubr.f32.gmra.mrb[0].mxu0 %v263
        %v601 = vpop.f32.mrb[0].mxu0
        %v602 = vadd.f32 %v457, %v601
        %v603 = vpop.f32.mrb[0].mxu0
        %604 = vmatprep.mubr.f32.mxu0 0.0
        %605 = vmatmul.mubr.f32.gmra.mrb[0].mxu0 %v266
        %v606 = vpop.f32.mrb[0].mxu0
        %v607 = vadd.f32 %v462, %v606
        %v608 = vpop.f32.mrb[0].mxu0
        %609 = vmatprep.mubr.f32.mxu0 0.0
        %610 = vmatmul.mubr.f32.gmra.mrb[0].mxu0 %v269
        %v611 = vpop.f32.mrb[0].mxu0
        %v612 = vadd.f32 %v467, %v611
        %v613 = vpop.f32.mrb[0].mxu0
        %614 = vdwg.mxu0
        %v615 = vxor.u32 %v537, 2147483648
        %v616 = vxor.u32 %v542, 2147483648
        %v617 = vxor.u32 %v547, 2147483648
        %v618 = vxor.u32 %v552, 2147483648
        %v619 = vxor.u32 %v557, 2147483648
        %v620 = vxor.u32 %v562, 2147483648
        %v621 = vxor.u32 %v567, 2147483648
        %v622 = vxor.u32 %v572, 2147483648
        %v623 = vxor.u32 %v577, 2147483648
        %v624 = vxor.u32 %v582, 2147483648
        %v625 = vxor.u32 %v587, 2147483648
        %v626 = vxor.u32 %v592, 2147483648
        %v627 = vxor.u32 %v597, 2147483648
        %v628 = vxor.u32 %v602, 2147483648
        %v629 = vxor.u32 %v607, 2147483648
        %v630 = vxor.u32 %v612, 2147483648
        %v631 = vmul.f32 %v615, 1.442695
        %v632 = vpow.pop %v631
        %v633 = vmul.f32 %v616, 1.442695
        %v634 = vpow.pop %v633
        %v635 = vmul.f32 %v617, 1.442695
        %v636 = vpow.pop %v635
        %v637 = vmul.f32 %v618, 1.442695
        %v638 = vpow.pop %v637
        %v639 = vmul.f32 %v619, 1.442695
        %v640 = vpow.pop %v639
        %v641 = vmul.f32 %v620, 1.442695
        %v642 = vpow.pop %v641
        %v643 = vmul.f32 %v621, 1.442695
        %v644 = vpow.pop %v643
        %v645 = vmul.f32 %v622, 1.442695
        %v646 = vpow.pop %v645
        %v647 = vmul.f32 %v623, 1.442695
        %v648 = vpow.pop %v647
        %v649 = vmul.f32 %v624, 1.442695
        %v650 = vpow.pop %v649
        %v651 = vmul.f32 %v625, 1.442695
        %v652 = vpow.pop %v651
        %v653 = vmul.f32 %v626, 1.442695
        %v654 = vpow.pop %v653
        %v655 = vmul.f32 %v627, 1.442695
        %v656 = vpow.pop %v655
        %v657 = vmul.f32 %v628, 1.442695
        %v658 = vpow.pop %v657
        %v659 = vmul.f32 %v629, 1.442695
        %v660 = vpow.pop %v659
        %v661 = vmul.f32 %v630, 1.442695
        %v662 = vpow.pop %v661
        %v663 = vadd.f32 %v632, 1.0
        %v664 = vadd.f32 %v634, 1.0
        %v665 = vadd.f32 %v636, 1.0
        %v666 = vadd.f32 %v638, 1.0
        %v667 = vadd.f32 %v640, 1.0
        %v668 = vadd.f32 %v642, 1.0
        %v669 = vadd.f32 %v644, 1.0
        %v670 = vadd.f32 %v646, 1.0
        %v671 = vadd.f32 %v648, 1.0
        %v672 = vadd.f32 %v650, 1.0
        %v673 = vadd.f32 %v652, 1.0
        %v674 = vadd.f32 %v654, 1.0
        %v675 = vadd.f32 %v656, 1.0
        %v676 = vadd.f32 %v658, 1.0
        %v677 = vadd.f32 %v660, 1.0
        %v678 = vadd.f32 %v662, 1.0
        %v679 = vrcp.pop %v663
        %v680 = vmul.f32 1.0, %v679
        %v681 = vrcp.pop %v664
        %v682 = vmul.f32 1.0, %v681
        %v683 = vrcp.pop %v665
        %v684 = vmul.f32 1.0, %v683
        %v685 = vrcp.pop %v666
        %v686 = vmul.f32 1.0, %v685
        %v687 = vrcp.pop %v667
        %v688 = vmul.f32 1.0, %v687
        %v689 = vrcp.pop %v668
        %v690 = vmul.f32 1.0, %v689
        %v691 = vrcp.pop %v669
        %v692 = vmul.f32 1.0, %v691
        %v693 = vrcp.pop %v670
        %v694 = vmul.f32 1.0, %v693
        %v695 = vrcp.pop %v671
        %v696 = vmul.f32 1.0, %v695
        %v697 = vrcp.pop %v672
        %v698 = vmul.f32 1.0, %v697
        %v699 = vrcp.pop %v673
        %v700 = vmul.f32 1.0, %v699
        %v701 = vrcp.pop %v674
        %v702 = vmul.f32 1.0, %v701
        %v703 = vrcp.pop %v675
        %v704 = vmul.f32 1.0, %v703
        %v705 = vrcp.pop %v676
        %v706 = vmul.f32 1.0, %v705
        %v707 = vrcp.pop %v677
        %v708 = vmul.f32 1.0, %v707
        %v709 = vrcp.pop %v678
        %v710 = vmul.f32 1.0, %v709
        %vm711 = vcmask 7168
        %712 = vst.msk [vmem:[%s220] sm:$0xff] %vm711, %v680
        %713 = vst.msk [vmem:[%s220 + $0x8] sm:$0xff] %vm711, %v682
        %714 = vst.msk [vmem:[%s220 + $0x10] sm:$0xff] %vm711, %v684
        %715 = vst.msk [vmem:[%s220 + $0x18] sm:$0xff] %vm711, %v686
        %716 = vst.msk [vmem:[%s220 + $0x20] sm:$0xff] %vm711, %v688
        %717 = vst.msk [vmem:[%s220 + $0x28] sm:$0xff] %vm711, %v690
        %718 = vst.msk [vmem:[%s220 + $0x30] sm:$0xff] %vm711, %v692
        %719 = vst.msk [vmem:[%s220 + $0x38] sm:$0xff] %vm711, %v694
        %720 = vst.msk [vmem:[%s220 + $0x40] sm:$0xff] %vm711, %v696
        %721 = vst.msk [vmem:[%s220 + $0x48] sm:$0xff] %vm711, %v698
        %722 = vst.msk [vmem:[%s220 + $0x50] sm:$0xff] %vm711, %v700
        %723 = vst.msk [vmem:[%s220 + $0x58] sm:$0xff] %vm711, %v702
        %724 = vst.msk [vmem:[%s220 + $0x60] sm:$0xff] %vm711, %v704
        %725 = vst.msk [vmem:[%s220 + $0x68] sm:$0xff] %vm711, %v706
        %726 = vst.msk [vmem:[%s220 + $0x70] sm:$0xff] %vm711, %v708
        %727 = vst.msk [vmem:[%s220 + $0x78] sm:$0xff] %vm711, %v710
        %s728 = smul.u32 16, %s24
        %p729 = scmp.lt.s32.totalorder %s23, 1
        %s730 = scalar_select %p729, %s23, 1
        %p731 = scmp.lt.s32.totalorder %s728, 31
        %s732 = scalar_select %p731, %s728, 31
        %s733 = smul.addr %s730, 32
        %s734 = sadd.s32 %s732, %s733
        %s735 = smul.addr %s734, 8
        %s736 = scalar_lea.vmem %s3, %s735
        // Predicated region
        $region37: #{tpu_custom_call.1} parent=31 // pred_check
          %p737 = pneg %p121
        $region38: #{tpu_custom_call.1} parent=31 // pred_check_branch
          %739 = sbr.rel (%p737) target = $region40
        $region39: #{tpu_custom_call.1} parent=31 // pred_region
          %s740 = smul.u32 16, %s24
        $region40: #{tpu_custom_call.1} parent=31 // pred_fallthru
          _
      $region32: #{tpu_custom_call.1} parent=5 // pred_fallthru
        _
      %p741 = scmp.le.s32.totalorder 2, %s14
      // Predicated region
      $region41: #{tpu_custom_call.1} parent=5 // pred_check
        %p742 = pneg %p741
      $region42: #{tpu_custom_call.1} parent=5 // pred_check_branch
        %744 = sbr.rel (%p742) target = $region44
      $region43: #{tpu_custom_call.1} parent=5 // pred_region
        %s745 = ssub.s32 %s14, 2
        // Predicated region
        $region45: #{tpu_custom_call.1} parent=43 // pred_check
          %p746 = pneg %p127
        $region46: #{tpu_custom_call.1} parent=43 // pred_check_branch
          %748 = sbr.rel (%p746) target = $region48
        $region47: #{tpu_custom_call.1} parent=43 // pred_region
          %s749 = smul.u32 16, %s26
          %p750 = scmp.lt.s32.totalorder %s25, 1
          %s751 = scalar_select %p750, %s25, 1
          %p752 = scmp.lt.s32.totalorder %s749, 31
          %s753 = scalar_select %p752, %s749, 31
          %s754 = smul.addr %s751, 32
          %s755 = sadd.s32 %s753, %s754
          %s756 = smul.addr %s755, 8
          %s757 = scalar_lea.vmem %s3, %s756
        $region48: #{tpu_custom_call.1} parent=43 // pred_fallthru
          _
      $region44: #{tpu_custom_call.1} parent=5 // pred_fallthru
        _
    $region6: #{tpu_custom_call.1} parent=1 // loop_footer
      %s18 = sadd.s32 1, %s14
    $region7: #{tpu_custom_call.1} parent=1 // loop_footer_branch
      %13 = sbr.rel target = $region3
    $region8: #{tpu_custom_call.1} parent=1 // loop_exit
      _
    %758 = vsyncpa [#allocation4], 1
    %s759 = scalar_lea.sflag [#allocation4], 1
    %760 = vsyncpa %s759, 1

</llo_original>
